<compile_context>
chip_gen: v5e
topology: v5e:2x2
jax: 0.10.0
libtpu: 0.0.40
codegen_flags: <defaults>
</compile_context>

<pallas_src>
import jax
import jax.numpy as jnp
from jax.experimental import pallas as pl
from jax.experimental.pallas import tpu as pltpu


def _round_up(n, m):
    return ((n + m - 1) // m) * m


def _mlp_kernel(x_ref, w1t_ref, b1_ref, w2t_ref, b2_ref, o_ref):
    """o = relu(x @ W1^T + b1) @ W2^T + b2  (weight_norm scales pre-folded into W1/W2)."""
    x = x_ref[...].astype(jnp.bfloat16)                     # in-kernel cast (VPU has slack)
    h = jnp.dot(x, w1t_ref[...], preferred_element_type=jnp.float32)   # [tb, hid_pad] f32
    h = jnp.maximum(h + b1_ref[...], 0.0)                   # fused bias + ReLU epilogue
    # TODO(synk): nn.Dropout is identity in eval mode; train-mode masking not implemented.
    out = jnp.dot(h.astype(jnp.bfloat16), w2t_ref[...],
                  preferred_element_type=jnp.float32)        # [tb, out_pad] f32
    o_ref[...] = (out + b2_ref[...]).astype(o_ref.dtype)


def prepare_params(params):
    """One-time weight prep (hoisted out of the forward path; cache the result).

    weight_norm(dim=None): W = (g / ||v||_F) * v. The scalar scale is folded into the
    cached, pre-transposed, lane-padded bf16 weights; biases become lane-dense f32 rows.
    """
    v1, g1, b1 = params["v1"], params["g1"], params["b1"]    # [hid, in], scalar, [hid]
    v2, g2, b2 = params["v2"], params["g2"], params["b2"]    # [out, hid], scalar, [out]
    hid_dim, in_dim = v1.shape
    out_dim = v2.shape[0]
    hid_pad = _round_up(hid_dim, 128)
    out_pad = _round_up(out_dim, 128)

    w1 = (g1 / jnp.linalg.norm(v1)) * v1
    w2 = (g2 / jnp.linalg.norm(v2)) * v2

    w1t = jnp.zeros((in_dim, hid_pad), jnp.bfloat16).at[:, :hid_dim].set(
        w1.T.astype(jnp.bfloat16))
    w2t = jnp.zeros((hid_pad, out_pad), jnp.bfloat16).at[:hid_dim, :out_dim].set(
        w2.T.astype(jnp.bfloat16))
    b1r = jnp.zeros((1, hid_pad), jnp.float32).at[0, :hid_dim].set(b1.astype(jnp.float32))
    b2r = jnp.zeros((1, out_pad), jnp.float32).at[0, :out_dim].set(b2.astype(jnp.float32))
    return {"w1t": w1t, "b1": b1r, "w2t": w2t, "b2": b2r,
            "in_dim": in_dim, "hid_dim": hid_dim, "out_dim": out_dim}


def _vmem_limit_bytes(footprint):
    """Generation-aware VMEM cap: 3/4 of physical VMEM (48 MiB on v7x, 96 MiB v5e/v6e)."""
    try:
        phys = int(pltpu.get_tpu_info().vmem_capacity_bytes)
    except Exception:
        phys = 64 << 20  # conservative fallback: v7x per-TC physical VMEM
    return int(min(max(2 * footprint, 16 << 20), (phys * 3) // 4))


def simple_classifier_forward(x, prep, *, block_b=512, unpad=True):
    """x: [B, in_dim] f32. prep: output of prepare_params() (reused across calls)."""
    B, in_dim = x.shape
    assert in_dim == prep["in_dim"]
    w1t, b1, w2t, b2 = prep["w1t"], prep["b1"], prep["w2t"], prep["b2"]
    hid_pad = w1t.shape[1]
    out_pad = w2t.shape[1]

    # Batch tile: large (amortizes ~0.35 us/step pipeline overhead, bigger M per MXU
    # push), multiple of 16 for bf16 sublane packing, capped so the grid keeps >= 2
    # parallel steps whenever possible (v7x megacore splits the batch).
    tb = min(block_b, _round_up(pl.cdiv(B, 2), 16))
    b_pad = _round_up(B, tb)
    if b_pad != B:
        x = jnp.pad(x, ((0, b_pad - B), (0, 0)))   # rows-only pad; no lane pad / cast
    grid = (b_pad // tb,)

    # Real VMEM footprint: double-buffered x/out tiles, single-buffered resident
    # weights/biases, plus f32/bf16 intermediates.
    footprint = (
        2 * tb * in_dim * 4                             # x tiles (f32, double-buffered)
        + 2 * tb * out_pad * 2                          # out tiles (bf16, double-buffered)
        + (in_dim * hid_pad + hid_pad * out_pad) * 2    # resident bf16 weights
        + (hid_pad + out_pad) * 4                       # resident f32 bias rows
        + tb * (2 * hid_pad + out_pad) * 4              # intermediates (generous)
    )

    def run(single_buffer_weights):
        kw = dict(pipeline_mode=pl.Buffered(1)) if single_buffer_weights else {}

        def resident(shape):
            # Constant index_map: operand stays VMEM-resident across the whole grid.
            return pl.BlockSpec(shape, lambda i: (0, 0), **kw)

        return pl.pallas_call(
            _mlp_kernel,
            out_shape=jax.ShapeDtypeStruct((b_pad, out_pad), jnp.bfloat16),
            grid=grid,
            in_specs=[
                pl.BlockSpec((tb, in_dim), lambda i: (i, 0)),   # activations (f32)
                resident((in_dim, hid_pad)),                    # W1^T (scale folded)
                resident((1, hid_pad)),                         # b1
                resident((hid_pad, out_pad)),                   # W2^T (scale folded)
                resident((1, out_pad)),                         # b2
            ],
            out_specs=pl.BlockSpec((tb, out_pad), lambda i: (i, 0)),
            compiler_params=pltpu.CompilerParams(
                dimension_semantics=("parallel",),
                vmem_limit_bytes=_vmem_limit_bytes(footprint),
            ),
        )(x, w1t, b1, w2t, b2)

    try:
        out = run(True)      # Buffered(1) resident weights (halves resident VMEM on v7x)
    except Exception:
        out = run(False)     # fallback: default double-buffered resident operands

    if unpad:
        out = out[:B, :prep["out_dim"]]
    return out


def init_params(key, in_dim, hid_dim, out_dim):
    k1, k2, k3, k4 = jax.random.split(key, 4)
    # nn.Linear default init: U(-1/sqrt(fan_in), 1/sqrt(fan_in)) for weight and bias.
    lim1 = 1.0 / jnp.sqrt(in_dim)
    lim2 = 1.0 / jnp.sqrt(hid_dim)
    v1 = jax.random.uniform(k1, (hid_dim, in_dim), jnp.float32, -lim1, lim1)
    b1 = jax.random.uniform(k2, (hid_dim,), jnp.float32, -lim1, lim1)
    v2 = jax.random.uniform(k3, (out_dim, hid_dim), jnp.float32, -lim2, lim2)
    b2 = jax.random.uniform(k4, (out_dim,), jnp.float32, -lim2, lim2)
    # weight_norm init: g = ||v||_F  (effective weight == v at init)
    g1 = jnp.linalg.norm(v1)
    g2 = jnp.linalg.norm(v2)
    return {"v1": v1, "g1": g1, "b1": b1, "v2": v2, "g2": g2, "b2": b2}


if __name__ == "__main__":
    # Small-but-representative shapes: exercises hid/out lane padding, an unpadded
    # f32 activation feed (in_dim=96), and a 2-step parallel batch grid (B=256, tb=128).
    B, in_dim, hid_dim, out_dim = 256, 96, 64, 4
    key = jax.random.PRNGKey(0)
    kx, kp = jax.random.split(key)
    x = jax.random.normal(kx, (B, in_dim), jnp.float32)
    params = init_params(kp, in_dim, hid_dim, out_dim)

    prep = prepare_params(params)            # one-time, cached across forward calls
    logits = simple_classifier_forward(x, prep)
    jax.block_until_ready(logits)

    # Reference in plain JAX f32 (weight_norm -> Linear -> ReLU -> (eval) Dropout -> Linear).
    w1 = (params["g1"] / jnp.linalg.norm(params["v1"])) * params["v1"]
    w2 = (params["g2"] / jnp.linalg.norm(params["v2"])) * params["v2"]
    ref = jnp.maximum(x @ w1.T + params["b1"], 0.0) @ w2.T + params["b2"]

    assert logits.shape == (B, out_dim)
    # bf16 MXU operands + bf16 output lose mantissa bits vs the f32 reference.
    assert jnp.allclose(logits.astype(jnp.float32), ref, atol=2e-2, rtol=2e-2), (
        float(jnp.max(jnp.abs(logits.astype(jnp.float32) - ref))))

    print("KERNEL_OK")
</pallas_src>

<mosaic_0001>
module attributes {stable_mosaic.version = 11 : i64} {
  func.func @_mlp_kernel(%arg0: i32, %arg1: memref<128x96xf32, #tpu.memory_space<vmem>>, %arg2: memref<96x128xbf16, #tpu.memory_space<vmem>>, %arg3: memref<1x128xf32, #tpu.memory_space<vmem>>, %arg4: memref<128x128xbf16, #tpu.memory_space<vmem>>, %arg5: memref<1x128xf32, #tpu.memory_space<vmem>>, %arg6: memref<128x128xbf16, #tpu.memory_space<vmem>>) attributes {dimension_semantics = [#tpu.dimension_semantics<parallel>], iteration_bounds = array<i64: 2>, scalar_prefetch = 0 : i64, scratch_operands = 0 : i64, tpu.core_type = #tpu.core_type<tc>, window_params = [{transform_indices = @transform_0, window_bounds = array<i64: 128, 96>}, {pipeline_mode = #tpu.pipeline_mode<synchronous>, transform_indices = @transform_1, window_bounds = array<i64: 96, 128>}, {pipeline_mode = #tpu.pipeline_mode<synchronous>, transform_indices = @transform_2, window_bounds = array<i64: 1, 128>}, {pipeline_mode = #tpu.pipeline_mode<synchronous>, transform_indices = @transform_3, window_bounds = array<i64: 128, 128>}, {pipeline_mode = #tpu.pipeline_mode<synchronous>, transform_indices = @transform_4, window_bounds = array<i64: 1, 128>}, {transform_indices = @transform_5, window_bounds = array<i64: 128, 128>}]} {
    %c0 = arith.constant 0 : index
    %c0_0 = arith.constant 0 : index
    %0 = vector.load %arg1[%c0, %c0_0] : memref<128x96xf32, #tpu.memory_space<vmem>>, vector<128x96xf32>
    %1 = arith.truncf %0 : vector<128x96xf32> to vector<128x96xbf16>
    %c0_1 = arith.constant 0 : index
    %c0_2 = arith.constant 0 : index
    %2 = vector.load %arg2[%c0_1, %c0_2] : memref<96x128xbf16, #tpu.memory_space<vmem>>, vector<96x128xbf16>
    %cst = arith.constant dense<0.000000e+00> : vector<128x128xf32>
    %3 = tpu.matmul %1, %2, %cst {dimension_numbers = #tpu.dot_dimension_numbers<[1], [0], [0], [1], [0, 0, 1, 1], [], []>} : vector<128x96xbf16>, vector<96x128xbf16>, vector<128x128xf32> -> vector<128x128xf32>
    %c0_3 = arith.constant 0 : index
    %c0_4 = arith.constant 0 : index
    %4 = vector.load %arg3[%c0_3, %c0_4] : memref<1x128xf32, #tpu.memory_space<vmem>>, vector<1x128xf32>
    %5 = vector.broadcast %4 : vector<1x128xf32> to vector<128x128xf32>
    %6 = arith.addf %3, %5 : vector<128x128xf32>
    %cst_5 = arith.constant 0.000000e+00 : f32
    %7 = vector.broadcast %cst_5 : f32 to vector<128x128xf32>
    %8 = arith.maximumf %6, %7 : vector<128x128xf32>
    %9 = arith.truncf %8 : vector<128x128xf32> to vector<128x128xbf16>
    %c0_6 = arith.constant 0 : index
    %c0_7 = arith.constant 0 : index
    %10 = vector.load %arg4[%c0_6, %c0_7] : memref<128x128xbf16, #tpu.memory_space<vmem>>, vector<128x128xbf16>
    %cst_8 = arith.constant dense<0.000000e+00> : vector<128x128xf32>
    %11 = tpu.matmul %9, %10, %cst_8 {dimension_numbers = #tpu.dot_dimension_numbers<[1], [0], [0], [1], [0, 0, 1, 1], [], []>} : vector<128x128xbf16>, vector<128x128xbf16>, vector<128x128xf32> -> vector<128x128xf32>
    %c0_9 = arith.constant 0 : index
    %c0_10 = arith.constant 0 : index
    %12 = vector.load %arg5[%c0_9, %c0_10] : memref<1x128xf32, #tpu.memory_space<vmem>>, vector<1x128xf32>
    %13 = vector.broadcast %12 : vector<1x128xf32> to vector<128x128xf32>
    %14 = arith.addf %11, %13 : vector<128x128xf32>
    %15 = arith.truncf %14 : vector<128x128xf32> to vector<128x128xbf16>
    %c0_11 = arith.constant 0 : index
    %c0_12 = arith.constant 0 : index
    %16 = vector.load %arg6[%c0_11, %c0_12] : memref<128x128xbf16, #tpu.memory_space<vmem>>, vector<128x128xbf16>
    tpu.vector_store %arg6[%c0_11, %c0_12], %15 {strides = array<i32>} : memref<128x128xbf16, #tpu.memory_space<vmem>>, vector<128x128xbf16>,
    return
  }
  func.func @transform_0(%arg0: i32) -> (i32, i32) {
    %c0_i32 = arith.constant 0 : i32
    %c0_i32_0 = arith.constant 0 : i32
    return %arg0, %c0_i32 : i32, i32
  }
  func.func @transform_1(%arg0: i32) -> (i32, i32) {
    %c0_i32 = arith.constant 0 : i32
    %c0_i32_0 = arith.constant 0 : i32
    %c0_i32_1 = arith.constant 0 : i32
    return %c0_i32, %c0_i32_0 : i32, i32
  }
  func.func @transform_2(%arg0: i32) -> (i32, i32) {
    %c0_i32 = arith.constant 0 : i32
    %c0_i32_0 = arith.constant 0 : i32
    %c0_i32_1 = arith.constant 0 : i32
    return %c0_i32, %c0_i32_0 : i32, i32
  }
  func.func @transform_3(%arg0: i32) -> (i32, i32) {
    %c0_i32 = arith.constant 0 : i32
    %c0_i32_0 = arith.constant 0 : i32
    %c0_i32_1 = arith.constant 0 : i32
    return %c0_i32, %c0_i32_0 : i32, i32
  }
  func.func @transform_4(%arg0: i32) -> (i32, i32) {
    %c0_i32 = arith.constant 0 : i32
    %c0_i32_0 = arith.constant 0 : i32
    %c0_i32_1 = arith.constant 0 : i32
    return %c0_i32, %c0_i32_0 : i32, i32
  }
  func.func @transform_5(%arg0: i32) -> (i32, i32) {
    %c0_i32 = arith.constant 0 : i32
    %c0_i32_0 = arith.constant 0 : i32
    return %arg0, %c0_i32 : i32, i32
  }
}

module attributes {stable_mosaic.version = 11 : i64} {
  func.func @_mlp_kernel(%arg0: i32, %arg1: memref<128x96xf32, #tpu.memory_space<vmem>>, %arg2: memref<96x128xbf16, #tpu.memory_space<vmem>>, %arg3: memref<1x128xf32, #tpu.memory_space<vmem>>, %arg4: memref<128x128xbf16, #tpu.memory_space<vmem>>, %arg5: memref<1x128xf32, #tpu.memory_space<vmem>>, %arg6: memref<128x128xbf16, #tpu.memory_space<vmem>>) attributes {dimension_semantics = [#tpu.dimension_semantics<parallel>], iteration_bounds = array<i64: 2>, scalar_prefetch = 0 : i64, scratch_operands = 0 : i64, tpu.core_type = #tpu.core_type<tc>, window_params = [{transform_indices = @transform_0, window_bounds = array<i64: 128, 96>}, {pipeline_mode = #tpu.pipeline_mode<synchronous>, transform_indices = @transform_1, window_bounds = array<i64: 96, 128>}, {pipeline_mode = #tpu.pipeline_mode<synchronous>, transform_indices = @transform_2, window_bounds = array<i64: 1, 128>}, {pipeline_mode = #tpu.pipeline_mode<synchronous>, transform_indices = @transform_3, window_bounds = array<i64: 128, 128>}, {pipeline_mode = #tpu.pipeline_mode<synchronous>, transform_indices = @transform_4, window_bounds = array<i64: 1, 128>}, {transform_indices = @transform_5, window_bounds = array<i64: 128, 128>}]} {
    %c0 = arith.constant 0 : index
    %c0_0 = arith.constant 0 : index
    %0 = vector.load %arg1[%c0, %c0_0] : memref<128x96xf32, #tpu.memory_space<vmem>>, vector<128x96xf32>
    %1 = arith.truncf %0 : vector<128x96xf32> to vector<128x96xbf16>
    %c0_1 = arith.constant 0 : index
    %c0_2 = arith.constant 0 : index
    %2 = vector.load %arg2[%c0_1, %c0_2] : memref<96x128xbf16, #tpu.memory_space<vmem>>, vector<96x128xbf16>
    %cst = arith.constant dense<0.000000e+00> : vector<128x128xf32>
    %3 = tpu.matmul %1, %2, %cst {dimension_numbers = #tpu.dot_dimension_numbers<[1], [0], [0], [1], [0, 0, 1, 1], [], []>} : vector<128x96xbf16>, vector<96x128xbf16>, vector<128x128xf32> -> vector<128x128xf32>
    %c0_3 = arith.constant 0 : index
    %c0_4 = arith.constant 0 : index
    %4 = vector.load %arg3[%c0_3, %c0_4] : memref<1x128xf32, #tpu.memory_space<vmem>>, vector<1x128xf32>
    %5 = vector.broadcast %4 : vector<1x128xf32> to vector<128x128xf32>
    %6 = arith.addf %3, %5 : vector<128x128xf32>
    %cst_5 = arith.constant 0.000000e+00 : f32
    %7 = vector.broadcast %cst_5 : f32 to vector<128x128xf32>
    %8 = arith.maximumf %6, %7 : vector<128x128xf32>
    %9 = arith.truncf %8 : vector<128x128xf32> to vector<128x128xbf16>
    %c0_6 = arith.constant 0 : index
    %c0_7 = arith.constant 0 : index
    %10 = vector.load %arg4[%c0_6, %c0_7] : memref<128x128xbf16, #tpu.memory_space<vmem>>, vector<128x128xbf16>
    %cst_8 = arith.constant dense<0.000000e+00> : vector<128x128xf32>
    %11 = tpu.matmul %9, %10, %cst_8 {dimension_numbers = #tpu.dot_dimension_numbers<[1], [0], [0], [1], [0, 0, 1, 1], [], []>} : vector<128x128xbf16>, vector<128x128xbf16>, vector<128x128xf32> -> vector<128x128xf32>
    %c0_9 = arith.constant 0 : index
    %c0_10 = arith.constant 0 : index
    %12 = vector.load %arg5[%c0_9, %c0_10] : memref<1x128xf32, #tpu.memory_space<vmem>>, vector<1x128xf32>
    %13 = vector.broadcast %12 : vector<1x128xf32> to vector<128x128xf32>
    %14 = arith.addf %11, %13 : vector<128x128xf32>
    %15 = arith.truncf %14 : vector<128x128xf32> to vector<128x128xbf16>
    %c0_11 = arith.constant 0 : index
    %c0_12 = arith.constant 0 : index
    %16 = vector.load %arg6[%c0_11, %c0_12] : memref<128x128xbf16, #tpu.memory_space<vmem>>, vector<128x128xbf16>
    tpu.vector_store %arg6[%c0_11, %c0_12], %15 {strides = array<i32>} : memref<128x128xbf16, #tpu.memory_space<vmem>>, vector<128x128xbf16>,
    return
  }
  func.func @transform_0(%arg0: i32) -> (i32, i32) {
    %c0_i32 = arith.constant 0 : i32
    %c0_i32_0 = arith.constant 0 : i32
    return %arg0, %c0_i32 : i32, i32
  }
  func.func @transform_1(%arg0: i32) -> (i32, i32) {
    %c0_i32 = arith.constant 0 : i32
    %c0_i32_0 = arith.constant 0 : i32
    %c0_i32_1 = arith.constant 0 : i32
    return %c0_i32, %c0_i32_0 : i32, i32
  }
  func.func @transform_2(%arg0: i32) -> (i32, i32) {
    %c0_i32 = arith.constant 0 : i32
    %c0_i32_0 = arith.constant 0 : i32
    %c0_i32_1 = arith.constant 0 : i32
    return %c0_i32, %c0_i32_0 : i32, i32
  }
  func.func @transform_3(%arg0: i32) -> (i32, i32) {
    %c0_i32 = arith.constant 0 : i32
    %c0_i32_0 = arith.constant 0 : i32
    %c0_i32_1 = arith.constant 0 : i32
    return %c0_i32, %c0_i32_0 : i32, i32
  }
  func.func @transform_4(%arg0: i32) -> (i32, i32) {
    %c0_i32 = arith.constant 0 : i32
    %c0_i32_0 = arith.constant 0 : i32
    %c0_i32_1 = arith.constant 0 : i32
    return %c0_i32, %c0_i32_0 : i32, i32
  }
  func.func @transform_5(%arg0: i32) -> (i32, i32) {
    %c0_i32 = arith.constant 0 : i32
    %c0_i32_0 = arith.constant 0 : i32
    return %arg0, %c0_i32 : i32, i32
  }
}

</mosaic_0001>

<llo_original>
// kernel: tpu_custom_call.1
$region0: #{tpu_custom_call.1}
  #allocation0 [shape = 'u32[]', space=smem, size = 0x4, offset = 0x4, fixed_abs, tag = 'smem constant byte address 0x4 - core index']
  #allocation1 [shape = 'u32[72,128]{1,0:T(1,128)}', space=vmem, size = 0x9000, scoped, tag = 'internal scratch']
  %s0 = inlined_call_operand.vmem [shape: f32[256,96], index: 0, kind: input, shape index: {}]
  %s1 = inlined_call_operand.vmem [shape: bf16[96,128], index: 1, kind: input, shape index: {}]
  %s2 = inlined_call_operand.vmem [shape: f32[1,128], index: 2, kind: input, shape index: {}]
  %s3 = inlined_call_operand.vmem [shape: bf16[128,128], index: 3, kind: input, shape index: {}]
  %s4 = inlined_call_operand.vmem [shape: f32[1,128], index: 4, kind: input, shape index: {}]
  %s5 = inlined_call_operand.hbm [shape: bf16[256,128], index: 5, kind: output, shape index: {}]
  %s6 = sld [smem:[#allocation0]]
  $region53: #{tpu_custom_call.1} parent=0
    _
  %s8 = ssub.s32 1, %s6
  %s9 = scalar_select 0, %s8, %s6
  $region1: #{tpu_custom_call.1} parent=0
    #allocation2 [shape = 'u8[65536]{0}', space=vmem, size = 0x10000, scoped, tag = 'output window, operand 0']
    #allocation3 [shape = 's32[2]{0}', space=sflag, size = 0x8, scoped, tag = 'scoped memory for tpu_custom_call.1']
    %10 = vsyncpa [#allocation3], 0
    %s11 = scalar_lea.sflag [#allocation3], 1
    %12 = vsyncpa %s11, 0
    loop: start=0, step=1, limit=4
    $region2: #{tpu_custom_call.1} parent=1 // loop_pre_header
      _
    $region3: #{tpu_custom_call.1} parent=1 // loop_header
      %s14 = sphi 0, %s18
      %p15 = scmp.ge.s32.totalorder %s14, 4
      %s24 = sphi 0, %s26
      %s27 = sphi 0, %s24
      %s28 = sphi 0, %s27
      %s44 = sphi 0, %s28
      %s48 = sphi 0, %s48
      %s50 = sphi 0, %s48
      %s51 = sphi 0, %s50
      %s65 = sphi 0, %s51
      %s69 = sphi 0, %s69
      %s71 = sphi 0, %s69
      %s72 = sphi 0, %s71
      %s86 = sphi 0, %s72
      %s90 = sphi 0, %s90
      %s92 = sphi 0, %s90
      %s93 = sphi 0, %s92
      %s107 = sphi 0, %s93
      %s111 = sphi 0, %s111
      %s113 = sphi 0, %s111
      %s114 = sphi 0, %s113
      %s128 = sphi 0, %s114
      %s134 = sphi 0, %s136
      %s137 = sphi 0, %s134
      %s138 = sphi 0, %s137
      %s154 = sphi 0, %s138
    $region4: #{tpu_custom_call.1} parent=1 // loop_header_branch
      %17 = sbr.rel (%p15) target = $region8
    $region5: #{tpu_custom_call.1} parent=1 // loop_body
      %s19 = ssub.s32 %s14, 1
      %s20 = ssub.s32 %s14, 2
      %s21 = sadd.s32 %s14, 1
      %s22 = ssub.s32 %s14, %s21
      %p23 = scmp.eq.s32.totalorder %s22, 0
      %s25 = sadd.s32 %s24, 1
      %s26 = scalar_select %p23, %s24, %s25
      %p29 = pneg %p23
      %p30 = scmp.eq.s32.totalorder %s14, 1
      %p31 = por %p29, %p30
      %p32 = scmp.ne.s32.totalorder %s24, %s27
      %p33 = scmp.eq.s32.totalorder %s14, 0
      %p34 = por %p32, %p33
      %p35 = scmp.ne.s32.totalorder %s24, %s27
      %p36 = scmp.eq.s32.totalorder %s19, 1
      %p37 = por %p35, %p36
      %p38 = scmp.ne.s32.totalorder %s27, %s28
      %p39 = scmp.eq.s32.totalorder %s19, 0
      %p40 = por %p38, %p39
      %p41 = scmp.ne.s32.totalorder %s27, %s28
      %p42 = scmp.eq.s32.totalorder %s20, 1
      %p43 = por %p41, %p42
      %p45 = scmp.ne.s32.totalorder %s28, %s44
      %p46 = scmp.eq.s32.totalorder %s20, 0
      %p47 = por %p45, %p46
      %s49 = sadd.s32 %s48, 1
      %p52 = scmp.eq.s32.totalorder %s14, 1
      %p53 = scmp.ne.s32.totalorder %s48, %s50
      %p54 = scmp.eq.s32.totalorder %s14, 0
      %p55 = por %p53, %p54
      %p56 = scmp.ne.s32.totalorder %s48, %s50
      %p57 = scmp.eq.s32.totalorder %s19, 1
      %p58 = por %p56, %p57
      %p59 = scmp.ne.s32.totalorder %s50, %s51
      %p60 = scmp.eq.s32.totalorder %s19, 0
      %p61 = por %p59, %p60
      %p62 = scmp.ne.s32.totalorder %s50, %s51
      %p63 = scmp.eq.s32.totalorder %s20, 1
      %p64 = por %p62, %p63
      %p66 = scmp.ne.s32.totalorder %s51, %s65
      %p67 = scmp.eq.s32.totalorder %s20, 0
      %p68 = por %p66, %p67
      %s70 = sadd.s32 %s69, 1
      %p73 = scmp.eq.s32.totalorder %s14, 1
      %p74 = scmp.ne.s32.totalorder %s69, %s71
      %p75 = scmp.eq.s32.totalorder %s14, 0
      %p76 = por %p74, %p75
      %p77 = scmp.ne.s32.totalorder %s69, %s71
      %p78 = scmp.eq.s32.totalorder %s19, 1
      %p79 = por %p77, %p78
      %p80 = scmp.ne.s32.totalorder %s71, %s72
      %p81 = scmp.eq.s32.totalorder %s19, 0
      %p82 = por %p80, %p81
      %p83 = scmp.ne.s32.totalorder %s71, %s72
      %p84 = scmp.eq.s32.totalorder %s20, 1
      %p85 = por %p83, %p84
      %p87 = scmp.ne.s32.totalorder %s72, %s86
      %p88 = scmp.eq.s32.totalorder %s20, 0
      %p89 = por %p87, %p88
      %s91 = sadd.s32 %s90, 1
      %p94 = scmp.eq.s32.totalorder %s14, 1
      %p95 = scmp.ne.s32.totalorder %s90, %s92
      %p96 = scmp.eq.s32.totalorder %s14, 0
      %p97 = por %p95, %p96
      %p98 = scmp.ne.s32.totalorder %s90, %s92
      %p99 = scmp.eq.s32.totalorder %s19, 1
      %p100 = por %p98, %p99
      %p101 = scmp.ne.s32.totalorder %s92, %s93
      %p102 = scmp.eq.s32.totalorder %s19, 0
      %p103 = por %p101, %p102
      %p104 = scmp.ne.s32.totalorder %s92, %s93
      %p105 = scmp.eq.s32.totalorder %s20, 1
      %p106 = por %p104, %p105
      %p108 = scmp.ne.s32.totalorder %s93, %s107
      %p109 = scmp.eq.s32.totalorder %s20, 0
      %p110 = por %p108, %p109
      %s112 = sadd.s32 %s111, 1
      %p115 = scmp.eq.s32.totalorder %s14, 1
      %p116 = scmp.ne.s32.totalorder %s111, %s113
      %p117 = scmp.eq.s32.totalorder %s14, 0
      %p118 = por %p116, %p117
      %p119 = scmp.ne.s32.totalorder %s111, %s113
      %p120 = scmp.eq.s32.totalorder %s19, 1
      %p121 = por %p119, %p120
      %p122 = scmp.ne.s32.totalorder %s113, %s114
      %p123 = scmp.eq.s32.totalorder %s19, 0
      %p124 = por %p122, %p123
      %p125 = scmp.ne.s32.totalorder %s113, %s114
      %p126 = scmp.eq.s32.totalorder %s20, 1
      %p127 = por %p125, %p126
      %p129 = scmp.ne.s32.totalorder %s114, %s128
      %p130 = scmp.eq.s32.totalorder %s20, 0
      %p131 = por %p129, %p130
      %s132 = ssub.s32 %s14, %s21
      %p133 = scmp.eq.s32.totalorder %s132, 0
      %s135 = sadd.s32 %s134, 1
      %s136 = scalar_select %p133, %s134, %s135
      %p139 = pneg %p133
      %p140 = scmp.eq.s32.totalorder %s14, 1
      %p141 = por %p139, %p140
      %p142 = scmp.ne.s32.totalorder %s134, %s137
      %p143 = scmp.eq.s32.totalorder %s14, 0
      %p144 = por %p142, %p143
      %p145 = scmp.ne.s32.totalorder %s134, %s137
      %p146 = scmp.eq.s32.totalorder %s19, 1
      %p147 = por %p145, %p146
      %p148 = scmp.ne.s32.totalorder %s137, %s138
      %p149 = scmp.eq.s32.totalorder %s19, 0
      %p150 = por %p148, %p149
      %p151 = scmp.ne.s32.totalorder %s137, %s138
      %p152 = scmp.eq.s32.totalorder %s20, 1
      %p153 = por %p151, %p152
      %p155 = scmp.ne.s32.totalorder %s138, %s154
      %p156 = scmp.eq.s32.totalorder %s20, 0
      %p157 = por %p155, %p156
      %p158 = scmp.le.s32.totalorder 1, %s14
      %p159 = scmp.lt.s32.totalorder %s14, 3
      %p160 = pnand %p158, %p159
      %p161 = pneg %p160
      // Predicated region
      $region9: #{tpu_custom_call.1} parent=5 // pred_check
        _
      $region10: #{tpu_custom_call.1} parent=5 // pred_check_branch
        %163 = sbr.rel (%p160) target = $region12
      $region11: #{tpu_custom_call.1} parent=5 // pred_region
        %s164 = ssub.s32 %s14, 1
        // Predicated region
        $region13: #{tpu_custom_call.1} parent=11 // pred_check
          %p165 = pneg %p61
        $region14: #{tpu_custom_call.1} parent=11 // pred_check_branch
          %167 = sbr.rel (%p165) target = $region16
        $region15: #{tpu_custom_call.1} parent=11 // pred_region
          _
        $region16: #{tpu_custom_call.1} parent=11 // pred_fallthru
          _
        // Predicated region
        $region17: #{tpu_custom_call.1} parent=11 // pred_check
          %p168 = pneg %p82
        $region18: #{tpu_custom_call.1} parent=11 // pred_check_branch
          %170 = sbr.rel (%p168) target = $region20
        $region19: #{tpu_custom_call.1} parent=11 // pred_region
          _
        $region20: #{tpu_custom_call.1} parent=11 // pred_fallthru
          _
        // Predicated region
        $region21: #{tpu_custom_call.1} parent=11 // pred_check
          %p171 = pneg %p103
        $region22: #{tpu_custom_call.1} parent=11 // pred_check_branch
          %173 = sbr.rel (%p171) target = $region24
        $region23: #{tpu_custom_call.1} parent=11 // pred_region
          _
        $region24: #{tpu_custom_call.1} parent=11 // pred_fallthru
          _
        // Predicated region
        $region25: #{tpu_custom_call.1} parent=11 // pred_check
          %p174 = pneg %p124
        $region26: #{tpu_custom_call.1} parent=11 // pred_check_branch
          %176 = sbr.rel (%p174) target = $region28
        $region27: #{tpu_custom_call.1} parent=11 // pred_region
          _
        $region28: #{tpu_custom_call.1} parent=11 // pred_fallthru
          _
      $region12: #{tpu_custom_call.1} parent=5 // pred_fallthru
        _
      %p177 = scmp.lt.s32.totalorder %s14, 2
      // Predicated region
      $region29: #{tpu_custom_call.1} parent=5 // pred_check
        %p178 = pneg %p177
      $region30: #{tpu_custom_call.1} parent=5 // pred_check_branch
        %180 = sbr.rel (%p178) target = $region32
      $region31: #{tpu_custom_call.1} parent=5 // pred_region
        // Predicated region
        $region33: #{tpu_custom_call.1} parent=31 // pred_check
          %p181 = pneg %p34
        $region34: #{tpu_custom_call.1} parent=31 // pred_check_branch
          %183 = sbr.rel (%p181) target = $region36
        $region35: #{tpu_custom_call.1} parent=31 // pred_region
          %s184 = smul.u32 16, %s14
          %p185 = scmp.lt.s32.totalorder %s184, 31
          %s186 = scalar_select %p185, %s184, 31
          %s187 = smul.addr %s186, 8
          %s188 = scalar_lea.vmem %s0, %s187
          %s189 = smul.u32 16, %s14
        $region36: #{tpu_custom_call.1} parent=31 // pred_fallthru
          _
      $region32: #{tpu_custom_call.1} parent=5 // pred_fallthru
        _
      %p190 = scmp.le.s32.totalorder 1, %s14
      %p191 = scmp.lt.s32.totalorder %s14, 3
      %p192 = pnand %p190, %p191
      %p193 = pneg %p192
      // Predicated region
      $region37: #{tpu_custom_call.1} parent=5 // pred_check
        _
      $region38: #{tpu_custom_call.1} parent=5 // pred_check_branch
        %195 = sbr.rel (%p192) target = $region40
      $region39: #{tpu_custom_call.1} parent=5 // pred_region
        %s196 = ssub.s32 %s14, 1
        %s197 = smul.u32 16, %s19
        %p198 = scmp.lt.s32.totalorder %s197, 31
        %s199 = scalar_select %p198, %s197, 31
        %s200 = smul.addr %s199, 8
        %s201 = scalar_lea.vmem %s0, %s200
        %p202 = pneg %p40
        %p203 = pneg %p37
        %p204 = pneg %p61
        %p205 = pneg %p58
        %p206 = pneg %p82
        %p207 = pneg %p79
        %p208 = pneg %p103
        %p209 = pneg %p100
        %p210 = pneg %p124
        %p211 = pneg %p121
        %p212 = pneg %p150
        %p213 = pneg %p147
        %s214 = sand.u32 %s137, 1
        %s215 = scalar_lea.sflag [#allocation3], %s214
        %s216 = sand.u32 %s137, 1
        %s217 = smul.addr %s216, 64
        %s218 = scalar_lea.vmem [#allocation2], %s217
        %s219 = smul.u32 16, %s19
        %p220 = scmp.lt.s32.totalorder %s219, 31
        %s221 = scalar_select %p220, %s219, 31
        %s222 = smul.addr %s221, 8
        %s223 = scalar_lea.vmem %s0, %s222
        %s224 = smul.u32 16, %s19
        %s225 = smul.u32 16, %s19
        %v227 = vld [vmem:[%s223] sm:$0xff]
        %v228 = vld [vmem:[%s223 + $0x8] sm:$0xff]
        %v229 = vld [vmem:[%s223 + $0x10] sm:$0xff]
        %v230 = vld [vmem:[%s223 + $0x18] sm:$0xff]
        %v231 = vld [vmem:[%s223 + $0x20] sm:$0xff]
        %v232 = vld [vmem:[%s223 + $0x28] sm:$0xff]
        %v233 = vld [vmem:[%s223 + $0x30] sm:$0xff]
        %v234 = vld [vmem:[%s223 + $0x38] sm:$0xff]
        %v235 = vld [vmem:[%s223 + $0x40] sm:$0xff]
        %v236 = vld [vmem:[%s223 + $0x48] sm:$0xff]
        %v237 = vld [vmem:[%s223 + $0x50] sm:$0xff]
        %v238 = vld [vmem:[%s223 + $0x58] sm:$0xff]
        %v239 = vld [vmem:[%s223 + $0x60] sm:$0xff]
        %v240 = vld [vmem:[%s223 + $0x68] sm:$0xff]
        %v241 = vld [vmem:[%s223 + $0x70] sm:$0xff]
        %v242 = vld [vmem:[%s223 + $0x78] sm:$0xff]
        %v243 = vpack.c.bf16 %v228, %v227
        %v244 = vpack.c.bf16 %v230, %v229
        %v245 = vpack.c.bf16 %v232, %v231
        %v246 = vpack.c.bf16 %v234, %v233
        %v247 = vpack.c.bf16 %v236, %v235
        %v248 = vpack.c.bf16 %v238, %v237
        %v249 = vpack.c.bf16 %v240, %v239
        %v250 = vpack.c.bf16 %v242, %v241
        %v251 = vld [vmem:[%s1] sm:$0xf]
        %v252 = vld [vmem:[%s1 + $0x4] sm:$0xf]
        %v253 = vld [vmem:[%s1 + $0x8] sm:$0xf]
        %v254 = vld [vmem:[%s1 + $0xc] sm:$0xf]
        %v255 = vld [vmem:[%s1 + $0x10] sm:$0xf]
        %v256 = vld [vmem:[%s1 + $0x14] sm:$0xf]
        %v257 = vld [vmem:[%s1 + $0x18] sm:$0xf]
        %v258 = vld [vmem:[%s1 + $0x1c] sm:$0xf]
        %v259 = vld [vmem:[%s1 + $0x20] sm:$0xf]
        %v260 = vld [vmem:[%s1 + $0x24] sm:$0xf]
        %v261 = vld [vmem:[%s1 + $0x28] sm:$0xf]
        %v262 = vld [vmem:[%s1 + $0x2c] sm:$0xf]
        %v263 = vld [vmem:[%s2] sm:$0x1]
        %v265 = vperm.slane %v263, 0
        %v279 = vunpack.c.l.b16 %v251
        %v280 = vunpack.c.l.b16 %v252
        %v281 = vunpack.c.l.b16 %v253
        %v282 = vunpack.c.l.b16 %v254
        %v283 = vunpack.c.l.b16 %v255
        %v284 = vunpack.c.l.b16 %v256
        %v285 = vunpack.c.l.b16 %v257
        %v286 = vunpack.c.l.b16 %v258
        %v287 = vunpack.c.l.b16 %v259
        %v288 = vunpack.c.l.b16 %v260
        %v289 = vunpack.c.l.b16 %v261
        %v290 = vunpack.c.l.b16 %v262
        %v291 = vpack.c.b16 %v280, %v279
        %v292 = vpack.c.b16 %v282, %v281
        %v293 = vpack.c.b16 %v284, %v283
        %v294 = vpack.c.b16 %v286, %v285
        %v295 = vpack.c.b16 %v288, %v287
        %v296 = vpack.c.b16 %v290, %v289
        %vm303 = vcmask 785408
        %v305 = vsel %vm303, %v243, 0
        %v308 = vsel %vm303, %v244, 0
        %v311 = vsel %vm303, %v245, 0
        %v314 = vsel %vm303, %v246, 0
        %v317 = vsel %vm303, %v247, 0
        %v320 = vsel %vm303, %v248, 0
        %v323 = vsel %vm303, %v249, 0
        %v326 = vsel %vm303, %v250, 0
        %328 = vmatpush.bf16.msra.mxu0 0
        %329 = vmatpush.bf16.msra.mxu0 0
        %330 = vmatpush.bf16.msra.mxu0 %v296
        %331 = vmatpush.bf16.msra.mxu0 %v295
        %332 = vmatpush.bf16.msra.mxu0 %v294
        %333 = vmatpush.bf16.msra.mxu0 %v293
        %334 = vmatpush.bf16.msra.mxu0 %v292
        %335 = vmatpush.bf16.msra.mxu0 %v291
        %336 = vmatmul.bf16.gmra.mxu0 %v305
        %v337 = vpop.f32.mrf.mxu0
        %v338 = vadd.f32 %v265, %v337
        %v339 = vpop.f32.mrf.mxu0
        %v340 = vadd.f32 %v265, %v339
        %341 = vmatmul.bf16.gmra.mxu0 %v308
        %v342 = vpop.f32.mrf.mxu0
        %v343 = vadd.f32 %v265, %v342
        %v344 = vpop.f32.mrf.mxu0
        %v345 = vadd.f32 %v265, %v344
        %346 = vmatmul.bf16.gmra.mxu0 %v311
        %v347 = vpop.f32.mrf.mxu0
        %v348 = vadd.f32 %v265, %v347
        %v349 = vpop.f32.mrf.mxu0
        %v350 = vadd.f32 %v265, %v349
        %351 = vmatmul.bf16.gmra.mxu0 %v314
        %v352 = vpop.f32.mrf.mxu0
        %v353 = vadd.f32 %v265, %v352
        %v354 = vpop.f32.mrf.mxu0
        %v355 = vadd.f32 %v265, %v354
        %356 = vmatmul.bf16.gmra.mxu0 %v317
        %v357 = vpop.f32.mrf.mxu0
        %v358 = vadd.f32 %v265, %v357
        %v359 = vpop.f32.mrf.mxu0
        %v360 = vadd.f32 %v265, %v359
        %361 = vmatmul.bf16.gmra.mxu0 %v320
        %v362 = vpop.f32.mrf.mxu0
        %v363 = vadd.f32 %v265, %v362
        %v364 = vpop.f32.mrf.mxu0
        %v365 = vadd.f32 %v265, %v364
        %366 = vmatmul.bf16.gmra.mxu0 %v323
        %v367 = vpop.f32.mrf.mxu0
        %v368 = vadd.f32 %v265, %v367
        %v369 = vpop.f32.mrf.mxu0
        %v370 = vadd.f32 %v265, %v369
        %371 = vmatmul.bf16.gmra.mxu0 %v326
        %v372 = vpop.f32.mrf.mxu0
        %v373 = vadd.f32 %v265, %v372
        %v374 = vpop.f32.mrf.mxu0
        %v375 = vadd.f32 %v265, %v374
        %376 = vdwg.mxu0
        %v377 = vmax.f32 %v338, 0.0
        %v378 = vmax.f32 %v340, 0.0
        %v379 = vmax.f32 %v343, 0.0
        %v380 = vmax.f32 %v345, 0.0
        %v381 = vmax.f32 %v348, 0.0
        %v382 = vmax.f32 %v350, 0.0
        %v383 = vmax.f32 %v353, 0.0
        %v384 = vmax.f32 %v355, 0.0
        %v385 = vmax.f32 %v358, 0.0
        %v386 = vmax.f32 %v360, 0.0
        %v387 = vmax.f32 %v363, 0.0
        %v388 = vmax.f32 %v365, 0.0
        %v389 = vmax.f32 %v368, 0.0
        %v390 = vmax.f32 %v370, 0.0
        %v391 = vmax.f32 %v373, 0.0
        %v392 = vmax.f32 %v375, 0.0
        %v393 = vpack.c.bf16 %v378, %v377
        %v394 = vpack.c.bf16 %v380, %v379
        %v395 = vpack.c.bf16 %v382, %v381
        %v396 = vpack.c.bf16 %v384, %v383
        %v397 = vpack.c.bf16 %v386, %v385
        %v398 = vpack.c.bf16 %v388, %v387
        %v399 = vpack.c.bf16 %v390, %v389
        %v400 = vpack.c.bf16 %v392, %v391
        %v401 = vld [vmem:[%s3] sm:$0xf]
        %v402 = vld [vmem:[%s3 + $0x4] sm:$0xf]
        %v403 = vld [vmem:[%s3 + $0x8] sm:$0xf]
        %v404 = vld [vmem:[%s3 + $0xc] sm:$0xf]
        %v405 = vld [vmem:[%s3 + $0x10] sm:$0xf]
        %v406 = vld [vmem:[%s3 + $0x14] sm:$0xf]
        %v407 = vld [vmem:[%s3 + $0x18] sm:$0xf]
        %v408 = vld [vmem:[%s3 + $0x1c] sm:$0xf]
        %v409 = vld [vmem:[%s3 + $0x20] sm:$0xf]
        %v410 = vld [vmem:[%s3 + $0x24] sm:$0xf]
        %v411 = vld [vmem:[%s3 + $0x28] sm:$0xf]
        %v412 = vld [vmem:[%s3 + $0x2c] sm:$0xf]
        %v413 = vld [vmem:[%s3 + $0x30] sm:$0xf]
        %v414 = vld [vmem:[%s3 + $0x34] sm:$0xf]
        %v415 = vld [vmem:[%s3 + $0x38] sm:$0xf]
        %v416 = vld [vmem:[%s3 + $0x3c] sm:$0xf]
        %v417 = vld [vmem:[%s4] sm:$0x1]
        %v419 = vperm.slane %v417, 0
        %v437 = vunpack.c.l.b16 %v401
        %v438 = vunpack.c.l.b16 %v402
        %v439 = vunpack.c.l.b16 %v403
        %v440 = vunpack.c.l.b16 %v404
        %v441 = vunpack.c.l.b16 %v405
        %v442 = vunpack.c.l.b16 %v406
        %v443 = vunpack.c.l.b16 %v407
        %v444 = vunpack.c.l.b16 %v408
        %v445 = vunpack.c.l.b16 %v409
        %v446 = vunpack.c.l.b16 %v410
        %v447 = vunpack.c.l.b16 %v411
        %v448 = vunpack.c.l.b16 %v412
        %v449 = vunpack.c.l.b16 %v413
        %v450 = vunpack.c.l.b16 %v414
        %v451 = vunpack.c.l.b16 %v415
        %v452 = vunpack.c.l.b16 %v416
        %v453 = vpack.c.b16 %v438, %v437
        %v454 = vpack.c.b16 %v440, %v439
        %v455 = vpack.c.b16 %v442, %v441
        %v456 = vpack.c.b16 %v444, %v443
        %v457 = vpack.c.b16 %v446, %v445
        %v458 = vpack.c.b16 %v448, %v447
        %v459 = vpack.c.b16 %v450, %v449
        %v460 = vpack.c.b16 %v452, %v451
        %469 = vmatpush.bf16.msra.mxu0 %v460
        %470 = vmatpush.bf16.msra.mxu0 %v459
        %471 = vmatpush.bf16.msra.mxu0 %v458
        %472 = vmatpush.bf16.msra.mxu0 %v457
        %473 = vmatpush.bf16.msra.mxu0 %v456
        %474 = vmatpush.bf16.msra.mxu0 %v455
        %475 = vmatpush.bf16.msra.mxu0 %v454
        %476 = vmatpush.bf16.msra.mxu0 %v453
        %477 = vmatmul.bf16.gmra.mxu0 %v393
        %v478 = vpop.f32.mrf.mxu0
        %v479 = vadd.f32 %v419, %v478
        %v480 = vpop.f32.mrf.mxu0
        %v481 = vadd.f32 %v419, %v480
        %482 = vmatmul.bf16.gmra.mxu0 %v394
        %v483 = vpop.f32.mrf.mxu0
        %v484 = vadd.f32 %v419, %v483
        %v485 = vpop.f32.mrf.mxu0
        %v486 = vadd.f32 %v419, %v485
        %487 = vmatmul.bf16.gmra.mxu0 %v395
        %v488 = vpop.f32.mrf.mxu0
        %v489 = vadd.f32 %v419, %v488
        %v490 = vpop.f32.mrf.mxu0
        %v491 = vadd.f32 %v419, %v490
        %492 = vmatmul.bf16.gmra.mxu0 %v396
        %v493 = vpop.f32.mrf.mxu0
        %v494 = vadd.f32 %v419, %v493
        %v495 = vpop.f32.mrf.mxu0
        %v496 = vadd.f32 %v419, %v495
        %497 = vmatmul.bf16.gmra.mxu0 %v397
        %v498 = vpop.f32.mrf.mxu0
        %v499 = vadd.f32 %v419, %v498
        %v500 = vpop.f32.mrf.mxu0
        %v501 = vadd.f32 %v419, %v500
        %502 = vmatmul.bf16.gmra.mxu0 %v398
        %v503 = vpop.f32.mrf.mxu0
        %v504 = vadd.f32 %v419, %v503
        %v505 = vpop.f32.mrf.mxu0
        %v506 = vadd.f32 %v419, %v505
        %507 = vmatmul.bf16.gmra.mxu0 %v399
        %v508 = vpop.f32.mrf.mxu0
        %v509 = vadd.f32 %v419, %v508
        %v510 = vpop.f32.mrf.mxu0
        %v511 = vadd.f32 %v419, %v510
        %512 = vmatmul.bf16.gmra.mxu0 %v400
        %v513 = vpop.f32.mrf.mxu0
        %v514 = vadd.f32 %v419, %v513
        %v515 = vpop.f32.mrf.mxu0
        %v516 = vadd.f32 %v419, %v515
        %517 = vdwg.mxu0
        %v518 = vpack.c.bf16 %v479, %v479
        %v519 = vpack.c.bf16 %v481, %v481
        %v520 = vpack.c.bf16 %v484, %v484
        %v521 = vpack.c.bf16 %v486, %v486
        %v522 = vpack.c.bf16 %v489, %v489
        %v523 = vpack.c.bf16 %v491, %v491
        %v524 = vpack.c.bf16 %v494, %v494
        %v525 = vpack.c.bf16 %v496, %v496
        %v526 = vpack.c.bf16 %v499, %v499
        %v527 = vpack.c.bf16 %v501, %v501
        %v528 = vpack.c.bf16 %v504, %v504
        %v529 = vpack.c.bf16 %v506, %v506
        %v530 = vpack.c.bf16 %v509, %v509
        %v531 = vpack.c.bf16 %v511, %v511
        %v532 = vpack.c.bf16 %v514, %v514
        %v533 = vpack.c.bf16 %v516, %v516
        %534 = vst [vmem:[%s218] sm:$0xf] %v518
        %535 = vst [vmem:[%s218 + $0x4] sm:$0xf] %v519
        %536 = vst [vmem:[%s218 + $0x8] sm:$0xf] %v520
        %537 = vst [vmem:[%s218 + $0xc] sm:$0xf] %v521
        %538 = vst [vmem:[%s218 + $0x10] sm:$0xf] %v522
        %539 = vst [vmem:[%s218 + $0x14] sm:$0xf] %v523
        %540 = vst [vmem:[%s218 + $0x18] sm:$0xf] %v524
        %541 = vst [vmem:[%s218 + $0x1c] sm:$0xf] %v525
        %542 = vst [vmem:[%s218 + $0x20] sm:$0xf] %v526
        %543 = vst [vmem:[%s218 + $0x24] sm:$0xf] %v527
        %544 = vst [vmem:[%s218 + $0x28] sm:$0xf] %v528
        %545 = vst [vmem:[%s218 + $0x2c] sm:$0xf] %v529
        %546 = vst [vmem:[%s218 + $0x30] sm:$0xf] %v530
        %547 = vst [vmem:[%s218 + $0x34] sm:$0xf] %v531
        %548 = vst [vmem:[%s218 + $0x38] sm:$0xf] %v532
        %549 = vst [vmem:[%s218 + $0x3c] sm:$0xf] %v533
        %s550 = sand.u32 %s137, 1
        %s551 = scalar_lea.sflag [#allocation3], %s550
        %s552 = sand.u32 %s137, 1
        %s553 = smul.addr %s552, 64
        %s554 = scalar_lea.vmem [#allocation2], %s553
        // Predicated region
        $region41: #{tpu_custom_call.1} parent=39 // pred_check
          %p555 = pneg %p147
        $region42: #{tpu_custom_call.1} parent=39 // pred_check_branch
          %557 = sbr.rel (%p555) target = $region44
        $region43: #{tpu_custom_call.1} parent=39 // pred_region
          %s558 = smul.u32 16, %s19
          %560 = vsyncadd %s551, 0
          %s561 = smul.addr %s558, 4
          %s562 = scalar_lea.hbm %s5, %s561
          %s563 = sshll.u32 %s554, 4
          %s564 = int_to_ptr.vmem [resolvable:$true] %s563
          %s565 = sshll.u32 %s562, 4
          %s566 = int_to_ptr.hbm [resolvable:$true] %s565
          %571 = dma.vmem_to_hbm [thread:$0]  %s564, 1024, %s566, %s551, 64, 64, 4
        $region44: #{tpu_custom_call.1} parent=39 // pred_fallthru
          _
      $region40: #{tpu_custom_call.1} parent=5 // pred_fallthru
        _
      %p572 = scmp.le.s32.totalorder 2, %s14
      // Predicated region
      $region45: #{tpu_custom_call.1} parent=5 // pred_check
        %p573 = pneg %p572
      $region46: #{tpu_custom_call.1} parent=5 // pred_check_branch
        %575 = sbr.rel (%p573) target = $region48
      $region47: #{tpu_custom_call.1} parent=5 // pred_region
        %s576 = ssub.s32 %s14, 2
        // Predicated region
        $region49: #{tpu_custom_call.1} parent=47 // pred_check
          %p577 = pneg %p153
        $region50: #{tpu_custom_call.1} parent=47 // pred_check_branch
          %579 = sbr.rel (%p577) target = $region52
        $region51: #{tpu_custom_call.1} parent=47 // pred_region
          %s580 = sand.u32 %s138, 1
          %s581 = scalar_lea.sflag [#allocation3], %s580
          %s582 = sand.u32 %s138, 1
          %s583 = smul.addr %s582, 64
          %s584 = scalar_lea.vmem [#allocation2], %s583
          %586 = dma.done %s581, 1024
        $region52: #{tpu_custom_call.1} parent=47 // pred_fallthru
          _
      $region48: #{tpu_custom_call.1} parent=5 // pred_fallthru
        _
    $region6: #{tpu_custom_call.1} parent=1 // loop_footer
      %s18 = sadd.s32 1, %s14
    $region7: #{tpu_custom_call.1} parent=1 // loop_footer_branch
      %13 = sbr.rel target = $region3
    $region8: #{tpu_custom_call.1} parent=1 // loop_exit
      _
    %587 = vsyncpa [#allocation3], 1
    %s588 = scalar_lea.sflag [#allocation3], 1
    %589 = vsyncpa %s588, 1

// kernel: tpu_custom_call.1
$region0: #{tpu_custom_call.1}
  #allocation0 [shape = 'u32[]', space=smem, size = 0x4, offset = 0x4, fixed_abs, tag = 'smem constant byte address 0x4 - core index']
  #allocation1 [shape = 'u32[72,128]{1,0:T(1,128)}', space=vmem, size = 0x9000, scoped, tag = 'internal scratch']
  %s0 = inlined_call_operand.vmem [shape: f32[256,96], index: 0, kind: input, shape index: {}]
  %s1 = inlined_call_operand.vmem [shape: bf16[96,128], index: 1, kind: input, shape index: {}]
  %s2 = inlined_call_operand.vmem [shape: f32[1,128], index: 2, kind: input, shape index: {}]
  %s3 = inlined_call_operand.vmem [shape: bf16[128,128], index: 3, kind: input, shape index: {}]
  %s4 = inlined_call_operand.vmem [shape: f32[1,128], index: 4, kind: input, shape index: {}]
  %s5 = inlined_call_operand.hbm [shape: bf16[256,128], index: 5, kind: output, shape index: {}]
  %s6 = sld [smem:[#allocation0]]
  $region53: #{tpu_custom_call.1} parent=0
    _
  %s8 = ssub.s32 1, %s6
  %s9 = scalar_select 0, %s8, %s6
  $region1: #{tpu_custom_call.1} parent=0
    #allocation2 [shape = 'u8[65536]{0}', space=vmem, size = 0x10000, scoped, tag = 'output window, operand 0']
    #allocation3 [shape = 's32[2]{0}', space=sflag, size = 0x8, scoped, tag = 'scoped memory for tpu_custom_call.1']
    %10 = vsyncpa [#allocation3], 0
    %s11 = scalar_lea.sflag [#allocation3], 1
    %12 = vsyncpa %s11, 0
    loop: start=0, step=1, limit=4
    $region2: #{tpu_custom_call.1} parent=1 // loop_pre_header
      _
    $region3: #{tpu_custom_call.1} parent=1 // loop_header
      %s14 = sphi 0, %s18
      %p15 = scmp.ge.s32.totalorder %s14, 4
      %s24 = sphi 0, %s26
      %s27 = sphi 0, %s24
      %s28 = sphi 0, %s27
      %s44 = sphi 0, %s28
      %s48 = sphi 0, %s48
      %s50 = sphi 0, %s48
      %s51 = sphi 0, %s50
      %s65 = sphi 0, %s51
      %s69 = sphi 0, %s69
      %s71 = sphi 0, %s69
      %s72 = sphi 0, %s71
      %s86 = sphi 0, %s72
      %s90 = sphi 0, %s90
      %s92 = sphi 0, %s90
      %s93 = sphi 0, %s92
      %s107 = sphi 0, %s93
      %s111 = sphi 0, %s111
      %s113 = sphi 0, %s111
      %s114 = sphi 0, %s113
      %s128 = sphi 0, %s114
      %s134 = sphi 0, %s136
      %s137 = sphi 0, %s134
      %s138 = sphi 0, %s137
      %s154 = sphi 0, %s138
    $region4: #{tpu_custom_call.1} parent=1 // loop_header_branch
      %17 = sbr.rel (%p15) target = $region8
    $region5: #{tpu_custom_call.1} parent=1 // loop_body
      %s19 = ssub.s32 %s14, 1
      %s20 = ssub.s32 %s14, 2
      %s21 = sadd.s32 %s14, 1
      %s22 = ssub.s32 %s14, %s21
      %p23 = scmp.eq.s32.totalorder %s22, 0
      %s25 = sadd.s32 %s24, 1
      %s26 = scalar_select %p23, %s24, %s25
      %p29 = pneg %p23
      %p30 = scmp.eq.s32.totalorder %s14, 1
      %p31 = por %p29, %p30
      %p32 = scmp.ne.s32.totalorder %s24, %s27
      %p33 = scmp.eq.s32.totalorder %s14, 0
      %p34 = por %p32, %p33
      %p35 = scmp.ne.s32.totalorder %s24, %s27
      %p36 = scmp.eq.s32.totalorder %s19, 1
      %p37 = por %p35, %p36
      %p38 = scmp.ne.s32.totalorder %s27, %s28
      %p39 = scmp.eq.s32.totalorder %s19, 0
      %p40 = por %p38, %p39
      %p41 = scmp.ne.s32.totalorder %s27, %s28
      %p42 = scmp.eq.s32.totalorder %s20, 1
      %p43 = por %p41, %p42
      %p45 = scmp.ne.s32.totalorder %s28, %s44
      %p46 = scmp.eq.s32.totalorder %s20, 0
      %p47 = por %p45, %p46
      %s49 = sadd.s32 %s48, 1
      %p52 = scmp.eq.s32.totalorder %s14, 1
      %p53 = scmp.ne.s32.totalorder %s48, %s50
      %p54 = scmp.eq.s32.totalorder %s14, 0
      %p55 = por %p53, %p54
      %p56 = scmp.ne.s32.totalorder %s48, %s50
      %p57 = scmp.eq.s32.totalorder %s19, 1
      %p58 = por %p56, %p57
      %p59 = scmp.ne.s32.totalorder %s50, %s51
      %p60 = scmp.eq.s32.totalorder %s19, 0
      %p61 = por %p59, %p60
      %p62 = scmp.ne.s32.totalorder %s50, %s51
      %p63 = scmp.eq.s32.totalorder %s20, 1
      %p64 = por %p62, %p63
      %p66 = scmp.ne.s32.totalorder %s51, %s65
      %p67 = scmp.eq.s32.totalorder %s20, 0
      %p68 = por %p66, %p67
      %s70 = sadd.s32 %s69, 1
      %p73 = scmp.eq.s32.totalorder %s14, 1
      %p74 = scmp.ne.s32.totalorder %s69, %s71
      %p75 = scmp.eq.s32.totalorder %s14, 0
      %p76 = por %p74, %p75
      %p77 = scmp.ne.s32.totalorder %s69, %s71
      %p78 = scmp.eq.s32.totalorder %s19, 1
      %p79 = por %p77, %p78
      %p80 = scmp.ne.s32.totalorder %s71, %s72
      %p81 = scmp.eq.s32.totalorder %s19, 0
      %p82 = por %p80, %p81
      %p83 = scmp.ne.s32.totalorder %s71, %s72
      %p84 = scmp.eq.s32.totalorder %s20, 1
      %p85 = por %p83, %p84
      %p87 = scmp.ne.s32.totalorder %s72, %s86
      %p88 = scmp.eq.s32.totalorder %s20, 0
      %p89 = por %p87, %p88
      %s91 = sadd.s32 %s90, 1
      %p94 = scmp.eq.s32.totalorder %s14, 1
      %p95 = scmp.ne.s32.totalorder %s90, %s92
      %p96 = scmp.eq.s32.totalorder %s14, 0
      %p97 = por %p95, %p96
      %p98 = scmp.ne.s32.totalorder %s90, %s92
      %p99 = scmp.eq.s32.totalorder %s19, 1
      %p100 = por %p98, %p99
      %p101 = scmp.ne.s32.totalorder %s92, %s93
      %p102 = scmp.eq.s32.totalorder %s19, 0
      %p103 = por %p101, %p102
      %p104 = scmp.ne.s32.totalorder %s92, %s93
      %p105 = scmp.eq.s32.totalorder %s20, 1
      %p106 = por %p104, %p105
      %p108 = scmp.ne.s32.totalorder %s93, %s107
      %p109 = scmp.eq.s32.totalorder %s20, 0
      %p110 = por %p108, %p109
      %s112 = sadd.s32 %s111, 1
      %p115 = scmp.eq.s32.totalorder %s14, 1
      %p116 = scmp.ne.s32.totalorder %s111, %s113
      %p117 = scmp.eq.s32.totalorder %s14, 0
      %p118 = por %p116, %p117
      %p119 = scmp.ne.s32.totalorder %s111, %s113
      %p120 = scmp.eq.s32.totalorder %s19, 1
      %p121 = por %p119, %p120
      %p122 = scmp.ne.s32.totalorder %s113, %s114
      %p123 = scmp.eq.s32.totalorder %s19, 0
      %p124 = por %p122, %p123
      %p125 = scmp.ne.s32.totalorder %s113, %s114
      %p126 = scmp.eq.s32.totalorder %s20, 1
      %p127 = por %p125, %p126
      %p129 = scmp.ne.s32.totalorder %s114, %s128
      %p130 = scmp.eq.s32.totalorder %s20, 0
      %p131 = por %p129, %p130
      %s132 = ssub.s32 %s14, %s21
      %p133 = scmp.eq.s32.totalorder %s132, 0
      %s135 = sadd.s32 %s134, 1
      %s136 = scalar_select %p133, %s134, %s135
      %p139 = pneg %p133
      %p140 = scmp.eq.s32.totalorder %s14, 1
      %p141 = por %p139, %p140
      %p142 = scmp.ne.s32.totalorder %s134, %s137
      %p143 = scmp.eq.s32.totalorder %s14, 0
      %p144 = por %p142, %p143
      %p145 = scmp.ne.s32.totalorder %s134, %s137
      %p146 = scmp.eq.s32.totalorder %s19, 1
      %p147 = por %p145, %p146
      %p148 = scmp.ne.s32.totalorder %s137, %s138
      %p149 = scmp.eq.s32.totalorder %s19, 0
      %p150 = por %p148, %p149
      %p151 = scmp.ne.s32.totalorder %s137, %s138
      %p152 = scmp.eq.s32.totalorder %s20, 1
      %p153 = por %p151, %p152
      %p155 = scmp.ne.s32.totalorder %s138, %s154
      %p156 = scmp.eq.s32.totalorder %s20, 0
      %p157 = por %p155, %p156
      %p158 = scmp.le.s32.totalorder 1, %s14
      %p159 = scmp.lt.s32.totalorder %s14, 3
      %p160 = pnand %p158, %p159
      %p161 = pneg %p160
      // Predicated region
      $region9: #{tpu_custom_call.1} parent=5 // pred_check
        _
      $region10: #{tpu_custom_call.1} parent=5 // pred_check_branch
        %163 = sbr.rel (%p160) target = $region12
      $region11: #{tpu_custom_call.1} parent=5 // pred_region
        %s164 = ssub.s32 %s14, 1
        // Predicated region
        $region13: #{tpu_custom_call.1} parent=11 // pred_check
          %p165 = pneg %p61
        $region14: #{tpu_custom_call.1} parent=11 // pred_check_branch
          %167 = sbr.rel (%p165) target = $region16
        $region15: #{tpu_custom_call.1} parent=11 // pred_region
          _
        $region16: #{tpu_custom_call.1} parent=11 // pred_fallthru
          _
        // Predicated region
        $region17: #{tpu_custom_call.1} parent=11 // pred_check
          %p168 = pneg %p82
        $region18: #{tpu_custom_call.1} parent=11 // pred_check_branch
          %170 = sbr.rel (%p168) target = $region20
        $region19: #{tpu_custom_call.1} parent=11 // pred_region
          _
        $region20: #{tpu_custom_call.1} parent=11 // pred_fallthru
          _
        // Predicated region
        $region21: #{tpu_custom_call.1} parent=11 // pred_check
          %p171 = pneg %p103
        $region22: #{tpu_custom_call.1} parent=11 // pred_check_branch
          %173 = sbr.rel (%p171) target = $region24
        $region23: #{tpu_custom_call.1} parent=11 // pred_region
          _
        $region24: #{tpu_custom_call.1} parent=11 // pred_fallthru
          _
        // Predicated region
        $region25: #{tpu_custom_call.1} parent=11 // pred_check
          %p174 = pneg %p124
        $region26: #{tpu_custom_call.1} parent=11 // pred_check_branch
          %176 = sbr.rel (%p174) target = $region28
        $region27: #{tpu_custom_call.1} parent=11 // pred_region
          _
        $region28: #{tpu_custom_call.1} parent=11 // pred_fallthru
          _
      $region12: #{tpu_custom_call.1} parent=5 // pred_fallthru
        _
      %p177 = scmp.lt.s32.totalorder %s14, 2
      // Predicated region
      $region29: #{tpu_custom_call.1} parent=5 // pred_check
        %p178 = pneg %p177
      $region30: #{tpu_custom_call.1} parent=5 // pred_check_branch
        %180 = sbr.rel (%p178) target = $region32
      $region31: #{tpu_custom_call.1} parent=5 // pred_region
        // Predicated region
        $region33: #{tpu_custom_call.1} parent=31 // pred_check
          %p181 = pneg %p34
        $region34: #{tpu_custom_call.1} parent=31 // pred_check_branch
          %183 = sbr.rel (%p181) target = $region36
        $region35: #{tpu_custom_call.1} parent=31 // pred_region
          %s184 = smul.u32 16, %s14
          %p185 = scmp.lt.s32.totalorder %s184, 31
          %s186 = scalar_select %p185, %s184, 31
          %s187 = smul.addr %s186, 8
          %s188 = scalar_lea.vmem %s0, %s187
          %s189 = smul.u32 16, %s14
        $region36: #{tpu_custom_call.1} parent=31 // pred_fallthru
          _
      $region32: #{tpu_custom_call.1} parent=5 // pred_fallthru
        _
      %p190 = scmp.le.s32.totalorder 1, %s14
      %p191 = scmp.lt.s32.totalorder %s14, 3
      %p192 = pnand %p190, %p191
      %p193 = pneg %p192
      // Predicated region
      $region37: #{tpu_custom_call.1} parent=5 // pred_check
        _
      $region38: #{tpu_custom_call.1} parent=5 // pred_check_branch
        %195 = sbr.rel (%p192) target = $region40
      $region39: #{tpu_custom_call.1} parent=5 // pred_region
        %s196 = ssub.s32 %s14, 1
        %s197 = smul.u32 16, %s19
        %p198 = scmp.lt.s32.totalorder %s197, 31
        %s199 = scalar_select %p198, %s197, 31
        %s200 = smul.addr %s199, 8
        %s201 = scalar_lea.vmem %s0, %s200
        %p202 = pneg %p40
        %p203 = pneg %p37
        %p204 = pneg %p61
        %p205 = pneg %p58
        %p206 = pneg %p82
        %p207 = pneg %p79
        %p208 = pneg %p103
        %p209 = pneg %p100
        %p210 = pneg %p124
        %p211 = pneg %p121
        %p212 = pneg %p150
        %p213 = pneg %p147
        %s214 = sand.u32 %s137, 1
        %s215 = scalar_lea.sflag [#allocation3], %s214
        %s216 = sand.u32 %s137, 1
        %s217 = smul.addr %s216, 64
        %s218 = scalar_lea.vmem [#allocation2], %s217
        %s219 = smul.u32 16, %s19
        %p220 = scmp.lt.s32.totalorder %s219, 31
        %s221 = scalar_select %p220, %s219, 31
        %s222 = smul.addr %s221, 8
        %s223 = scalar_lea.vmem %s0, %s222
        %s224 = smul.u32 16, %s19
        %s225 = smul.u32 16, %s19
        %v227 = vld [vmem:[%s223] sm:$0xff]
        %v228 = vld [vmem:[%s223 + $0x8] sm:$0xff]
        %v229 = vld [vmem:[%s223 + $0x10] sm:$0xff]
        %v230 = vld [vmem:[%s223 + $0x18] sm:$0xff]
        %v231 = vld [vmem:[%s223 + $0x20] sm:$0xff]
        %v232 = vld [vmem:[%s223 + $0x28] sm:$0xff]
        %v233 = vld [vmem:[%s223 + $0x30] sm:$0xff]
        %v234 = vld [vmem:[%s223 + $0x38] sm:$0xff]
        %v235 = vld [vmem:[%s223 + $0x40] sm:$0xff]
        %v236 = vld [vmem:[%s223 + $0x48] sm:$0xff]
        %v237 = vld [vmem:[%s223 + $0x50] sm:$0xff]
        %v238 = vld [vmem:[%s223 + $0x58] sm:$0xff]
        %v239 = vld [vmem:[%s223 + $0x60] sm:$0xff]
        %v240 = vld [vmem:[%s223 + $0x68] sm:$0xff]
        %v241 = vld [vmem:[%s223 + $0x70] sm:$0xff]
        %v242 = vld [vmem:[%s223 + $0x78] sm:$0xff]
        %v243 = vpack.c.bf16 %v228, %v227
        %v244 = vpack.c.bf16 %v230, %v229
        %v245 = vpack.c.bf16 %v232, %v231
        %v246 = vpack.c.bf16 %v234, %v233
        %v247 = vpack.c.bf16 %v236, %v235
        %v248 = vpack.c.bf16 %v238, %v237
        %v249 = vpack.c.bf16 %v240, %v239
        %v250 = vpack.c.bf16 %v242, %v241
        %v251 = vld [vmem:[%s1] sm:$0xf]
        %v252 = vld [vmem:[%s1 + $0x4] sm:$0xf]
        %v253 = vld [vmem:[%s1 + $0x8] sm:$0xf]
        %v254 = vld [vmem:[%s1 + $0xc] sm:$0xf]
        %v255 = vld [vmem:[%s1 + $0x10] sm:$0xf]
        %v256 = vld [vmem:[%s1 + $0x14] sm:$0xf]
        %v257 = vld [vmem:[%s1 + $0x18] sm:$0xf]
        %v258 = vld [vmem:[%s1 + $0x1c] sm:$0xf]
        %v259 = vld [vmem:[%s1 + $0x20] sm:$0xf]
        %v260 = vld [vmem:[%s1 + $0x24] sm:$0xf]
        %v261 = vld [vmem:[%s1 + $0x28] sm:$0xf]
        %v262 = vld [vmem:[%s1 + $0x2c] sm:$0xf]
        %v263 = vld [vmem:[%s2] sm:$0x1]
        %v265 = vperm.slane %v263, 0
        %v279 = vunpack.c.l.b16 %v251
        %v280 = vunpack.c.l.b16 %v252
        %v281 = vunpack.c.l.b16 %v253
        %v282 = vunpack.c.l.b16 %v254
        %v283 = vunpack.c.l.b16 %v255
        %v284 = vunpack.c.l.b16 %v256
        %v285 = vunpack.c.l.b16 %v257
        %v286 = vunpack.c.l.b16 %v258
        %v287 = vunpack.c.l.b16 %v259
        %v288 = vunpack.c.l.b16 %v260
        %v289 = vunpack.c.l.b16 %v261
        %v290 = vunpack.c.l.b16 %v262
        %v291 = vpack.c.b16 %v280, %v279
        %v292 = vpack.c.b16 %v282, %v281
        %v293 = vpack.c.b16 %v284, %v283
        %v294 = vpack.c.b16 %v286, %v285
        %v295 = vpack.c.b16 %v288, %v287
        %v296 = vpack.c.b16 %v290, %v289
        %vm303 = vcmask 785408
        %v305 = vsel %vm303, %v243, 0
        %v308 = vsel %vm303, %v244, 0
        %v311 = vsel %vm303, %v245, 0
        %v314 = vsel %vm303, %v246, 0
        %v317 = vsel %vm303, %v247, 0
        %v320 = vsel %vm303, %v248, 0
        %v323 = vsel %vm303, %v249, 0
        %v326 = vsel %vm303, %v250, 0
        %328 = vmatpush.bf16.msra.mxu0 0
        %329 = vmatpush.bf16.msra.mxu0 0
        %330 = vmatpush.bf16.msra.mxu0 %v296
        %331 = vmatpush.bf16.msra.mxu0 %v295
        %332 = vmatpush.bf16.msra.mxu0 %v294
        %333 = vmatpush.bf16.msra.mxu0 %v293
        %334 = vmatpush.bf16.msra.mxu0 %v292
        %335 = vmatpush.bf16.msra.mxu0 %v291
        %336 = vmatmul.bf16.gmra.mxu0 %v305
        %v337 = vpop.f32.mrf.mxu0
        %v338 = vadd.f32 %v265, %v337
        %v339 = vpop.f32.mrf.mxu0
        %v340 = vadd.f32 %v265, %v339
        %341 = vmatmul.bf16.gmra.mxu0 %v308
        %v342 = vpop.f32.mrf.mxu0
        %v343 = vadd.f32 %v265, %v342
        %v344 = vpop.f32.mrf.mxu0
        %v345 = vadd.f32 %v265, %v344
        %346 = vmatmul.bf16.gmra.mxu0 %v311
        %v347 = vpop.f32.mrf.mxu0
        %v348 = vadd.f32 %v265, %v347
        %v349 = vpop.f32.mrf.mxu0
        %v350 = vadd.f32 %v265, %v349
        %351 = vmatmul.bf16.gmra.mxu0 %v314
        %v352 = vpop.f32.mrf.mxu0
        %v353 = vadd.f32 %v265, %v352
        %v354 = vpop.f32.mrf.mxu0
        %v355 = vadd.f32 %v265, %v354
        %356 = vmatmul.bf16.gmra.mxu0 %v317
        %v357 = vpop.f32.mrf.mxu0
        %v358 = vadd.f32 %v265, %v357
        %v359 = vpop.f32.mrf.mxu0
        %v360 = vadd.f32 %v265, %v359
        %361 = vmatmul.bf16.gmra.mxu0 %v320
        %v362 = vpop.f32.mrf.mxu0
        %v363 = vadd.f32 %v265, %v362
        %v364 = vpop.f32.mrf.mxu0
        %v365 = vadd.f32 %v265, %v364
        %366 = vmatmul.bf16.gmra.mxu0 %v323
        %v367 = vpop.f32.mrf.mxu0
        %v368 = vadd.f32 %v265, %v367
        %v369 = vpop.f32.mrf.mxu0
        %v370 = vadd.f32 %v265, %v369
        %371 = vmatmul.bf16.gmra.mxu0 %v326
        %v372 = vpop.f32.mrf.mxu0
        %v373 = vadd.f32 %v265, %v372
        %v374 = vpop.f32.mrf.mxu0
        %v375 = vadd.f32 %v265, %v374
        %376 = vdwg.mxu0
        %v377 = vmax.f32 %v338, 0.0
        %v378 = vmax.f32 %v340, 0.0
        %v379 = vmax.f32 %v343, 0.0
        %v380 = vmax.f32 %v345, 0.0
        %v381 = vmax.f32 %v348, 0.0
        %v382 = vmax.f32 %v350, 0.0
        %v383 = vmax.f32 %v353, 0.0
        %v384 = vmax.f32 %v355, 0.0
        %v385 = vmax.f32 %v358, 0.0
        %v386 = vmax.f32 %v360, 0.0
        %v387 = vmax.f32 %v363, 0.0
        %v388 = vmax.f32 %v365, 0.0
        %v389 = vmax.f32 %v368, 0.0
        %v390 = vmax.f32 %v370, 0.0
        %v391 = vmax.f32 %v373, 0.0
        %v392 = vmax.f32 %v375, 0.0
        %v393 = vpack.c.bf16 %v378, %v377
        %v394 = vpack.c.bf16 %v380, %v379
        %v395 = vpack.c.bf16 %v382, %v381
        %v396 = vpack.c.bf16 %v384, %v383
        %v397 = vpack.c.bf16 %v386, %v385
        %v398 = vpack.c.bf16 %v388, %v387
        %v399 = vpack.c.bf16 %v390, %v389
        %v400 = vpack.c.bf16 %v392, %v391
        %v401 = vld [vmem:[%s3] sm:$0xf]
        %v402 = vld [vmem:[%s3 + $0x4] sm:$0xf]
        %v403 = vld [vmem:[%s3 + $0x8] sm:$0xf]
        %v404 = vld [vmem:[%s3 + $0xc] sm:$0xf]
        %v405 = vld [vmem:[%s3 + $0x10] sm:$0xf]
        %v406 = vld [vmem:[%s3 + $0x14] sm:$0xf]
        %v407 = vld [vmem:[%s3 + $0x18] sm:$0xf]
        %v408 = vld [vmem:[%s3 + $0x1c] sm:$0xf]
        %v409 = vld [vmem:[%s3 + $0x20] sm:$0xf]
        %v410 = vld [vmem:[%s3 + $0x24] sm:$0xf]
        %v411 = vld [vmem:[%s3 + $0x28] sm:$0xf]
        %v412 = vld [vmem:[%s3 + $0x2c] sm:$0xf]
        %v413 = vld [vmem:[%s3 + $0x30] sm:$0xf]
        %v414 = vld [vmem:[%s3 + $0x34] sm:$0xf]
        %v415 = vld [vmem:[%s3 + $0x38] sm:$0xf]
        %v416 = vld [vmem:[%s3 + $0x3c] sm:$0xf]
        %v417 = vld [vmem:[%s4] sm:$0x1]
        %v419 = vperm.slane %v417, 0
        %v437 = vunpack.c.l.b16 %v401
        %v438 = vunpack.c.l.b16 %v402
        %v439 = vunpack.c.l.b16 %v403
        %v440 = vunpack.c.l.b16 %v404
        %v441 = vunpack.c.l.b16 %v405
        %v442 = vunpack.c.l.b16 %v406
        %v443 = vunpack.c.l.b16 %v407
        %v444 = vunpack.c.l.b16 %v408
        %v445 = vunpack.c.l.b16 %v409
        %v446 = vunpack.c.l.b16 %v410
        %v447 = vunpack.c.l.b16 %v411
        %v448 = vunpack.c.l.b16 %v412
        %v449 = vunpack.c.l.b16 %v413
        %v450 = vunpack.c.l.b16 %v414
        %v451 = vunpack.c.l.b16 %v415
        %v452 = vunpack.c.l.b16 %v416
        %v453 = vpack.c.b16 %v438, %v437
        %v454 = vpack.c.b16 %v440, %v439
        %v455 = vpack.c.b16 %v442, %v441
        %v456 = vpack.c.b16 %v444, %v443
        %v457 = vpack.c.b16 %v446, %v445
        %v458 = vpack.c.b16 %v448, %v447
        %v459 = vpack.c.b16 %v450, %v449
        %v460 = vpack.c.b16 %v452, %v451
        %469 = vmatpush.bf16.msra.mxu0 %v460
        %470 = vmatpush.bf16.msra.mxu0 %v459
        %471 = vmatpush.bf16.msra.mxu0 %v458
        %472 = vmatpush.bf16.msra.mxu0 %v457
        %473 = vmatpush.bf16.msra.mxu0 %v456
        %474 = vmatpush.bf16.msra.mxu0 %v455
        %475 = vmatpush.bf16.msra.mxu0 %v454
        %476 = vmatpush.bf16.msra.mxu0 %v453
        %477 = vmatmul.bf16.gmra.mxu0 %v393
        %v478 = vpop.f32.mrf.mxu0
        %v479 = vadd.f32 %v419, %v478
        %v480 = vpop.f32.mrf.mxu0
        %v481 = vadd.f32 %v419, %v480
        %482 = vmatmul.bf16.gmra.mxu0 %v394
        %v483 = vpop.f32.mrf.mxu0
        %v484 = vadd.f32 %v419, %v483
        %v485 = vpop.f32.mrf.mxu0
        %v486 = vadd.f32 %v419, %v485
        %487 = vmatmul.bf16.gmra.mxu0 %v395
        %v488 = vpop.f32.mrf.mxu0
        %v489 = vadd.f32 %v419, %v488
        %v490 = vpop.f32.mrf.mxu0
        %v491 = vadd.f32 %v419, %v490
        %492 = vmatmul.bf16.gmra.mxu0 %v396
        %v493 = vpop.f32.mrf.mxu0
        %v494 = vadd.f32 %v419, %v493
        %v495 = vpop.f32.mrf.mxu0
        %v496 = vadd.f32 %v419, %v495
        %497 = vmatmul.bf16.gmra.mxu0 %v397
        %v498 = vpop.f32.mrf.mxu0
        %v499 = vadd.f32 %v419, %v498
        %v500 = vpop.f32.mrf.mxu0
        %v501 = vadd.f32 %v419, %v500
        %502 = vmatmul.bf16.gmra.mxu0 %v398
        %v503 = vpop.f32.mrf.mxu0
        %v504 = vadd.f32 %v419, %v503
        %v505 = vpop.f32.mrf.mxu0
        %v506 = vadd.f32 %v419, %v505
        %507 = vmatmul.bf16.gmra.mxu0 %v399
        %v508 = vpop.f32.mrf.mxu0
        %v509 = vadd.f32 %v419, %v508
        %v510 = vpop.f32.mrf.mxu0
        %v511 = vadd.f32 %v419, %v510
        %512 = vmatmul.bf16.gmra.mxu0 %v400
        %v513 = vpop.f32.mrf.mxu0
        %v514 = vadd.f32 %v419, %v513
        %v515 = vpop.f32.mrf.mxu0
        %v516 = vadd.f32 %v419, %v515
        %517 = vdwg.mxu0
        %v518 = vpack.c.bf16 %v479, %v479
        %v519 = vpack.c.bf16 %v481, %v481
        %v520 = vpack.c.bf16 %v484, %v484
        %v521 = vpack.c.bf16 %v486, %v486
        %v522 = vpack.c.bf16 %v489, %v489
        %v523 = vpack.c.bf16 %v491, %v491
        %v524 = vpack.c.bf16 %v494, %v494
        %v525 = vpack.c.bf16 %v496, %v496
        %v526 = vpack.c.bf16 %v499, %v499
        %v527 = vpack.c.bf16 %v501, %v501
        %v528 = vpack.c.bf16 %v504, %v504
        %v529 = vpack.c.bf16 %v506, %v506
        %v530 = vpack.c.bf16 %v509, %v509
        %v531 = vpack.c.bf16 %v511, %v511
        %v532 = vpack.c.bf16 %v514, %v514
        %v533 = vpack.c.bf16 %v516, %v516
        %534 = vst [vmem:[%s218] sm:$0xf] %v518
        %535 = vst [vmem:[%s218 + $0x4] sm:$0xf] %v519
        %536 = vst [vmem:[%s218 + $0x8] sm:$0xf] %v520
        %537 = vst [vmem:[%s218 + $0xc] sm:$0xf] %v521
        %538 = vst [vmem:[%s218 + $0x10] sm:$0xf] %v522
        %539 = vst [vmem:[%s218 + $0x14] sm:$0xf] %v523
        %540 = vst [vmem:[%s218 + $0x18] sm:$0xf] %v524
        %541 = vst [vmem:[%s218 + $0x1c] sm:$0xf] %v525
        %542 = vst [vmem:[%s218 + $0x20] sm:$0xf] %v526
        %543 = vst [vmem:[%s218 + $0x24] sm:$0xf] %v527
        %544 = vst [vmem:[%s218 + $0x28] sm:$0xf] %v528
        %545 = vst [vmem:[%s218 + $0x2c] sm:$0xf] %v529
        %546 = vst [vmem:[%s218 + $0x30] sm:$0xf] %v530
        %547 = vst [vmem:[%s218 + $0x34] sm:$0xf] %v531
        %548 = vst [vmem:[%s218 + $0x38] sm:$0xf] %v532
        %549 = vst [vmem:[%s218 + $0x3c] sm:$0xf] %v533
        %s550 = sand.u32 %s137, 1
        %s551 = scalar_lea.sflag [#allocation3], %s550
        %s552 = sand.u32 %s137, 1
        %s553 = smul.addr %s552, 64
        %s554 = scalar_lea.vmem [#allocation2], %s553
        // Predicated region
        $region41: #{tpu_custom_call.1} parent=39 // pred_check
          %p555 = pneg %p147
        $region42: #{tpu_custom_call.1} parent=39 // pred_check_branch
          %557 = sbr.rel (%p555) target = $region44
        $region43: #{tpu_custom_call.1} parent=39 // pred_region
          %s558 = smul.u32 16, %s19
          %560 = vsyncadd %s551, 0
          %s561 = smul.addr %s558, 4
          %s562 = scalar_lea.hbm %s5, %s561
          %s563 = sshll.u32 %s554, 4
          %s564 = int_to_ptr.vmem [resolvable:$true] %s563
          %s565 = sshll.u32 %s562, 4
          %s566 = int_to_ptr.hbm [resolvable:$true] %s565
          %571 = dma.vmem_to_hbm [thread:$0]  %s564, 1024, %s566, %s551, 64, 64, 4
        $region44: #{tpu_custom_call.1} parent=39 // pred_fallthru
          _
      $region40: #{tpu_custom_call.1} parent=5 // pred_fallthru
        _
      %p572 = scmp.le.s32.totalorder 2, %s14
      // Predicated region
      $region45: #{tpu_custom_call.1} parent=5 // pred_check
        %p573 = pneg %p572
      $region46: #{tpu_custom_call.1} parent=5 // pred_check_branch
        %575 = sbr.rel (%p573) target = $region48
      $region47: #{tpu_custom_call.1} parent=5 // pred_region
        %s576 = ssub.s32 %s14, 2
        // Predicated region
        $region49: #{tpu_custom_call.1} parent=47 // pred_check
          %p577 = pneg %p153
        $region50: #{tpu_custom_call.1} parent=47 // pred_check_branch
          %579 = sbr.rel (%p577) target = $region52
        $region51: #{tpu_custom_call.1} parent=47 // pred_region
          %s580 = sand.u32 %s138, 1
          %s581 = scalar_lea.sflag [#allocation3], %s580
          %s582 = sand.u32 %s138, 1
          %s583 = smul.addr %s582, 64
          %s584 = scalar_lea.vmem [#allocation2], %s583
          %586 = dma.done %s581, 1024
        $region52: #{tpu_custom_call.1} parent=47 // pred_fallthru
          _
      $region48: #{tpu_custom_call.1} parent=5 // pred_fallthru
        _
    $region6: #{tpu_custom_call.1} parent=1 // loop_footer
      %s18 = sadd.s32 1, %s14
    $region7: #{tpu_custom_call.1} parent=1 // loop_footer_branch
      %13 = sbr.rel target = $region3
    $region8: #{tpu_custom_call.1} parent=1 // loop_exit
      _
    %587 = vsyncpa [#allocation3], 1
    %s588 = scalar_lea.sflag [#allocation3], 1
    %589 = vsyncpa %s588, 1

</llo_original>
